<compile_context>
chip_gen: v7x
topology: tpu7x:2x2x1
jax: 0.10.0
libtpu: 0.0.40
codegen_flags: <defaults>
</compile_context>

<pallas_src>
import functools
import math

import jax
import jax.numpy as jnp
from jax.experimental import pallas as pl
from jax.experimental.pallas import tpu as pltpu


_ROW_GRANULE = 256                     # row-tile granule (matches 256x256 MXU)
_VMEM_LIMIT = 48 * 1024 * 1024         # headroom under v7x 64MiB, > default scoped
# TODO(synk): make the row granule generation-aware (128 on v5e's 4x128^2 MXU).


# --------------------------- shape helpers ----------------------------------

def _round_up(n, m):
    return -(-n // m) * m


def _pad_rows(x, multiple=_ROW_GRANULE):
    """Zero-pad the leading (row) dim up to a multiple of `multiple`."""
    m = x.shape[0]
    mp = _round_up(m, multiple)
    if mp == m:
        return x
    return jnp.pad(x, ((0, mp - m),) + ((0, 0),) * (x.ndim - 1))


def _padded_seq_len(seq, batch, granule=_ROW_GRANULE):
    """Smallest Sp >= seq with batch*Sp % granule == 0 and Sp % 8 == 0."""
    step = granule // math.gcd(batch, granule)
    step = step * 8 // math.gcd(step, 8)            # lcm(step, 8)
    return _round_up(seq, step)


def _pick_tile(dim, candidates):
    for c in candidates:
        if dim % c == 0:
            return c
    return dim


_TM_CANDIDATES = (256, 128, 64, 32, 16, 8)
_LN_TM_CANDIDATES = (512, 256, 128, 64, 32, 16, 8)


# --------------------------- fused matmul kernel -----------------------------
# out = [residual +] act( LN?(A) @ W [+ bias] )   with bf16 MXU, f32 accumulate.
# Grid is 1-D over row tiles; W is a full (K, N) resident block (fetched once).

def _make_fused_matmul_kernel(has_ln, has_bias, has_res, activation, eps):
    def kernel(*refs):
        i = 0
        a_ref = refs[i]; i += 1
        b_ref = refs[i]; i += 1
        if has_ln:
            g_ref = refs[i]; i += 1
            beta_ref = refs[i]; i += 1
        if has_bias:
            bias_ref = refs[i]; i += 1
        if has_res:
            res_ref = refs[i]; i += 1
        o_ref = refs[i]

        a = a_ref[...]
        if has_ln:                                         # LayerNorm prologue (f32)
            a = a.astype(jnp.float32)
            mean = jnp.mean(a, axis=-1, keepdims=True)
            var = jnp.mean(jnp.square(a - mean), axis=-1, keepdims=True)
            a = (a - mean) * jax.lax.rsqrt(var + eps)
            a = a * g_ref[...] + beta_ref[...]

        acc = jnp.dot(a.astype(jnp.bfloat16), b_ref[...],  # bf16 MXU, f32 acc
                      preferred_element_type=jnp.float32)
        if has_bias:
            acc = acc + bias_ref[...]
        if activation == "quick_gelu":                     # CLIP QuickGELU (f32)
            acc = acc * jax.nn.sigmoid(1.702 * acc)
        if has_res:                                        # fused residual add
            acc = acc + res_ref[...]
        o_ref[...] = acc.astype(o_ref.dtype)
    return kernel


def fused_matmul(a, b_bf16, *, bias=None, ln_gamma=None, ln_beta=None,
                 residual=None, activation=None, eps=1e-5,
                 out_dtype=jnp.float32):
    """[M,K] @ [K,N] with optional fused LN prologue / bias / GELU / residual.

    Callers pad M to a multiple of 256; K stays un-tiled (required for the LN
    prologue) and the weight block is resident across the whole M grid.
    """
    M, K = a.shape
    Kb, N = b_bf16.shape
    assert K == Kb
    tm = _pick_tile(M, _TM_CANDIDATES)
    assert M % tm == 0

    has_ln = ln_gamma is not None
    has_bias = bias is not None
    has_res = residual is not None

    inputs = [a, b_bf16.astype(jnp.bfloat16)]
    in_specs = [pl.BlockSpec((tm, K), lambda i: (i, 0)),
                pl.BlockSpec((K, N), lambda i: (0, 0))]    # resident weight
    if has_ln:
        inputs += [ln_gamma.reshape(1, K).astype(jnp.float32),
                   ln_beta.reshape(1, K).astype(jnp.float32)]
        in_specs += [pl.BlockSpec((1, K), lambda i: (0, 0)),
                     pl.BlockSpec((1, K), lambda i: (0, 0))]
    if has_bias:
        inputs.append(bias.reshape(1, N).astype(jnp.float32))
        in_specs.append(pl.BlockSpec((1, N), lambda i: (0, 0)))
    if has_res:
        inputs.append(residual)
        in_specs.append(pl.BlockSpec((tm, N), lambda i: (i, 0)))

    kernel = _make_fused_matmul_kernel(has_ln, has_bias, has_res,
                                       activation, eps)
    return pl.pallas_call(
        kernel,
        out_shape=jax.ShapeDtypeStruct((M, N), out_dtype),
        grid=(M // tm,),
        in_specs=in_specs,
        out_specs=pl.BlockSpec((tm, N), lambda i: (i, 0)),
        compiler_params=pltpu.CompilerParams(
            dimension_semantics=("parallel",),
            vmem_limit_bytes=_VMEM_LIMIT),
    )(*inputs)


# --------------------------- standalone LayerNorm (ln_pre) -------------------

def _ln_kernel(x_ref, g_ref, b_ref, o_ref, *, eps):
    x = x_ref[...].astype(jnp.float32)
    mean = jnp.mean(x, axis=-1, keepdims=True)
    var = jnp.mean(jnp.square(x - mean), axis=-1, keepdims=True)
    o_ref[...] = (x - mean) * jax.lax.rsqrt(var + eps) * g_ref[...] + b_ref[...]


def layernorm(x, gamma, beta, eps=1e-5):
    """Row-tiled LayerNorm over last dim of [M, D] (M padded by callers)."""
    M, D = x.shape
    tm = _pick_tile(M, _LN_TM_CANDIDATES)
    return pl.pallas_call(
        functools.partial(_ln_kernel, eps=eps),
        out_shape=jax.ShapeDtypeStruct((M, D), jnp.float32),
        grid=(M // tm,),
        in_specs=[pl.BlockSpec((tm, D), lambda i: (i, 0)),
                  pl.BlockSpec((1, D), lambda i: (0, 0)),
                  pl.BlockSpec((1, D), lambda i: (0, 0))],
        out_specs=pl.BlockSpec((tm, D), lambda i: (i, 0)),
        compiler_params=pltpu.CompilerParams(
            dimension_semantics=("parallel",),
            vmem_limit_bytes=_VMEM_LIMIT),
    )(x.astype(jnp.float32),
      gamma.reshape(1, D).astype(jnp.float32),
      beta.reshape(1, D).astype(jnp.float32))


# --------------------------- multi-head attention ----------------------------
# qkv is stored with columns grouped per head-group (done once at prep time):
#   [q(group0) | k(group0) | v(group0) | q(group1) | ...], group width = 128 lanes.
# Grid = (batch, n_groups): small per-step DMA, lane-aligned output stores.
# The 1/sqrt(dh) scale is folded into the q projection weights/bias.

def _head_group_size(heads, dh):
    """Smallest #heads whose combined width is a 128-lane multiple."""
    g = 128 // math.gcd(dh, 128)
    if g > heads or heads % g != 0:
        g = heads                      # fall back to all heads (full-D block)
    return g


def _mha_kernel(qkv_ref, o_ref, *, g_heads, dh, s_real):
    sp = qkv_ref.shape[1]              # padded sequence length
    gw = g_heads * dh
    need_mask = s_real < sp
    if need_mask:                      # mask padded key tokens (static shape)
        key_mask = jax.lax.broadcasted_iota(jnp.int32, (sp, sp), 1) < s_real
    outs = []
    for h in range(g_heads):           # static unroll within the head group
        q = qkv_ref[0, :, h * dh:(h + 1) * dh]                     # bf16, pre-scaled
        k = qkv_ref[0, :, gw + h * dh:gw + (h + 1) * dh]
        v = qkv_ref[0, :, 2 * gw + h * dh:2 * gw + (h + 1) * dh]
        s = jax.lax.dot_general(q, k, (((1,), (1,)), ((), ())),    # no explicit k.T
                                preferred_element_type=jnp.float32)
        if need_mask:
            s = jnp.where(key_mask, s, -1e30)
        m = jnp.max(s, axis=-1, keepdims=True)
        p = jnp.exp(s - m)
        denom = jnp.sum(p, axis=-1, keepdims=True)
        p = p * pl.reciprocal(denom, approx=True)                  # EUP reciprocal
        outs.append(jax.lax.dot_general(p.astype(jnp.bfloat16), v,
                                        (((1,), (0,)), ((), ())),
                                        preferred_element_type=jnp.float32))
    out = outs[0] if g_heads == 1 else jnp.concatenate(outs, axis=-1)
    o_ref[0] = out.astype(o_ref.dtype)     # single 128-lane-aligned store / group


def mha(qkv, *, heads, dh, s_real, out_dtype=jnp.bfloat16):
    """qkv: [B, Sp, 3D] (head-group-reordered, bf16) -> [B, Sp, D]."""
    # TODO(synk): for very long sequences (ViT-L/14@336) switch to a
    # flash-style (tq, tk) tiled kernel with online softmax.
    B, Sp, D3 = qkv.shape
    D = D3 // 3
    g_heads = _head_group_size(heads, dh)
    n_groups = heads // g_heads
    gw = g_heads * dh
    kernel = functools.partial(_mha_kernel, g_heads=g_heads, dh=dh, s_real=s_real)
    return pl.pallas_call(
        kernel,
        out_shape=jax.ShapeDtypeStruct((B, Sp, D), out_dtype),
        grid=(B, n_groups),
        in_specs=[pl.BlockSpec((1, Sp, 3 * gw), lambda b, g: (b, 0, g))],
        out_specs=pl.BlockSpec((1, Sp, gw), lambda b, g: (b, 0, g)),
        compiler_params=pltpu.CompilerParams(
            dimension_semantics=("parallel", "parallel"),
            vmem_limit_bytes=_VMEM_LIMIT),
    )(qkv)


# --------------------------- model glue (plain JAX) --------------------------

def residual_attention_block(x2, lp, *, batch, seq, heads, dh, s_real):
    """CLIP ResidualAttentionBlock on the flat [B*Sp, D] f32 residual stream."""
    D = x2.shape[1]
    # attention branch: LN1 fused into in_proj (bf16 qkv out), residual fused
    # into out_proj (f32 stream out).
    qkv = fused_matmul(x2, lp["in_proj_wT"], bias=lp["in_proj_b"],
                       ln_gamma=lp["ln1_g"], ln_beta=lp["ln1_b"],
                       out_dtype=jnp.bfloat16)                     # [M, 3D] bf16
    attn = mha(qkv.reshape(batch, seq, 3 * D), heads=heads, dh=dh,
               s_real=s_real, out_dtype=jnp.bfloat16)              # [B, Sp, D] bf16
    x2 = fused_matmul(attn.reshape(batch * seq, D), lp["out_proj_wT"],
                      bias=lp["out_proj_b"], residual=x2,
                      out_dtype=jnp.float32)                       # [M, D] f32
    # MLP branch: LN2 + QuickGELU fused into c_fc (bf16 hidden), residual
    # fused into c_proj.
    h = fused_matmul(x2, lp["c_fc_wT"], bias=lp["c_fc_b"],
                     ln_gamma=lp["ln2_g"], ln_beta=lp["ln2_b"],
                     activation="quick_gelu", out_dtype=jnp.bfloat16)  # [M,4D] bf16
    x2 = fused_matmul(h, lp["c_proj_wT"], bias=lp["c_proj_b"],
                      residual=x2, out_dtype=jnp.float32)          # [M, D] f32
    return x2


def visual_encoder_forward(params, x, prompt_embeddings, deep_prompt_embeddings,
                           *, heads, num_prompts, deep=True):
    B, C, H, W = x.shape
    P = params["patch_size"]
    D = params["class_embedding"].shape[0]
    dh = D // heads

    # conv1 (kernel=stride=P, bias=False) as patch extraction + matmul
    gh, gw_ = H // P, W // P
    n_tok = gh * gw_
    patches = x.reshape(B, C, gh, P, gw_, P).transpose(0, 2, 4, 1, 3, 5)
    patches = patches.reshape(B * n_tok, C * P * P)
    tok = fused_matmul(_pad_rows(patches), params["conv1_wT"])[:B * n_tok]
    tok = tok.reshape(B, n_tok, D)

    # class token + positional embedding
    cls = jnp.broadcast_to(params["class_embedding"].reshape(1, 1, D), (B, 1, D))
    tok = jnp.concatenate([cls, tok], axis=1) + params["positional_embedding"][None]

    # insert visual prompts after the class token
    # TODO(synk): prompt_dropout is eval-mode identity (no dropout applied)
    prompts = jnp.broadcast_to(prompt_embeddings[None], (B, num_prompts, D))
    tok = jnp.concatenate([tok[:, :1], prompts, tok[:, 1:]], axis=1)
    S = tok.shape[1]

    # pad the sequence once so B*Sp is a 256-row multiple; padded tokens sit at
    # the end of the sequence and are masked out as attention keys.
    Sp = _padded_seq_len(S, B)
    if Sp > S:
        tok = jnp.pad(tok, ((0, 0), (0, Sp - S), (0, 0)))
    M = B * Sp

    tok = layernorm(tok.reshape(M, D), params["ln_pre_g"], params["ln_pre_b"])

    # transformer with deep prompt injection (the PyTorch reference ADDS the
    # deep prompt to the previous layer's prompt tokens, which we replicate).
    for i, lp in enumerate(params["layers"]):
        if deep and i > 0 and i <= deep_prompt_embeddings.shape[0]:
            t = tok.reshape(B, Sp, D)
            dp = deep_prompt_embeddings[i - 1][None]               # [1, np, D]
            t = jnp.concatenate(
                [t[:, :1],
                 dp + t[:, 1:1 + num_prompts],
                 t[:, 1 + num_prompts:]], axis=1)
            tok = t.reshape(M, D)
        tok = residual_attention_block(tok, lp, batch=B, seq=Sp,
                                       heads=heads, dh=dh, s_real=S)

    # ln_post + proj fused, applied to [cls, prompt] tokens in one call
    t = tok.reshape(B, Sp, D)
    head_tokens = t[:, :1 + num_prompts, :].reshape(B * (1 + num_prompts), D)
    feats = fused_matmul(_pad_rows(head_tokens), params["projT"],
                         ln_gamma=params["ln_post_g"],
                         ln_beta=params["ln_post_b"])[:B * (1 + num_prompts)]
    out_dim = params["projT"].shape[1]
    feats = feats.reshape(B, 1 + num_prompts, out_dim)
    return feats[:, 0, :], feats[:, 1:, :]


# --------------------------- parameter init / prep ---------------------------

def init_params(key, *, width, patch_size, in_ch, n_patches, layers, out_dim):
    """Deterministic params in the PyTorch layout."""
    ks = iter(jax.random.split(key, 64))
    nrm = lambda shape, s=0.02: s * jax.random.normal(next(ks), shape, jnp.float32)
    p = {
        "patch_size": patch_size,
        "conv1_w": nrm((width, in_ch, patch_size, patch_size)),
        "class_embedding": nrm((width,)),
        "positional_embedding": nrm((n_patches + 1, width)),
        "ln_pre_g": jnp.ones((width,), jnp.float32),
        "ln_pre_b": jnp.zeros((width,), jnp.float32),
        "ln_post_g": jnp.ones((width,), jnp.float32),
        "ln_post_b": jnp.zeros((width,), jnp.float32),
        "proj": nrm((width, out_dim)),
        "layers": [],
    }
    for _ in range(layers):
        p["layers"].append({
            "ln1_g": jnp.ones((width,), jnp.float32),
            "ln1_b": jnp.zeros((width,), jnp.float32),
            "in_proj_w": nrm((3 * width, width)),
            "in_proj_b": jnp.zeros((3 * width,), jnp.float32),
            "out_proj_w": nrm((width, width)),
            "out_proj_b": jnp.zeros((width,), jnp.float32),
            "ln2_g": jnp.ones((width,), jnp.float32),
            "ln2_b": jnp.zeros((width,), jnp.float32),
            "c_fc_w": nrm((4 * width, width)),
            "c_fc_b": jnp.zeros((4 * width,), jnp.float32),
            "c_proj_w": nrm((width, 4 * width)),
            "c_proj_b": jnp.zeros((width,), jnp.float32),
        })
    return p


def _reorder_qkv_last_dim(x, D, heads, dh, g_heads):
    """[.., q|k|v] -> [.., q(g0)|k(g0)|v(g0)|q(g1)|...] grouped per head-group."""
    gw = g_heads * dh
    pieces = []
    for g in range(heads // g_heads):
        for part in range(3):                       # q, k, v
            base = part * D + g * gw
            pieces.append(x[..., base:base + gw])
    return jnp.concatenate(pieces, axis=-1)


def prepare_params(p, *, heads):
    """One-time weight prep: transpose to [K,N], cast to bf16, fold the
    attention scale into q, and reorder qkv columns per head-group."""
    D = p["class_embedding"].shape[0]
    P = p["patch_size"]
    C = p["conv1_w"].shape[1]
    dh = D // heads
    g_heads = _head_group_size(heads, dh)
    q = {
        "patch_size": P,
        "conv1_wT": p["conv1_w"].reshape(D, C * P * P).T.astype(jnp.bfloat16),
        "class_embedding": p["class_embedding"],
        "positional_embedding": p["positional_embedding"],
        "ln_pre_g": p["ln_pre_g"], "ln_pre_b": p["ln_pre_b"],
        "ln_post_g": p["ln_post_g"], "ln_post_b": p["ln_post_b"],
        "projT": p["proj"].astype(jnp.bfloat16),        # already [D, out_dim]
        "layers": [],
    }
    scale = dh ** -0.5
    col_scale = jnp.concatenate([jnp.full((D,), scale, jnp.float32),
                                 jnp.ones((2 * D,), jnp.float32)])
    for lp in p["layers"]:
        in_wT = lp["in_proj_w"].T.astype(jnp.float32) * col_scale[None, :]
        in_b = lp["in_proj_b"].astype(jnp.float32) * col_scale
        in_wT = _reorder_qkv_last_dim(in_wT, D, heads, dh, g_heads)
        in_b = _reorder_qkv_last_dim(in_b, D, heads, dh, g_heads)
        q["layers"].append({
            "ln1_g": lp["ln1_g"], "ln1_b": lp["ln1_b"],
            "in_proj_wT": in_wT.astype(jnp.bfloat16),
            "in_proj_b": in_b,
            "out_proj_wT": lp["out_proj_w"].T.astype(jnp.bfloat16),
            "out_proj_b": lp["out_proj_b"],
            "ln2_g": lp["ln2_g"], "ln2_b": lp["ln2_b"],
            "c_fc_wT": lp["c_fc_w"].T.astype(jnp.bfloat16),
            "c_fc_b": lp["c_fc_b"],
            "c_proj_wT": lp["c_proj_w"].T.astype(jnp.bfloat16),
            "c_proj_b": lp["c_proj_b"],
        })
    return q


# --------------------------- main --------------------------------------------

if __name__ == "__main__":
    # small synthetic config consistent with the module's forward
    # (dh=64 so the head-pair grouping path is exercised, like real CLIP)
    B, C, RES, PATCH = 2, 3, 16, 8
    WIDTH, HEADS, LAYERS = 256, 4, 2
    NUM_PROMPTS, OUT_DIM = 3, 128
    N_PATCHES = (RES // PATCH) ** 2

    key = jax.random.PRNGKey(0)
    k_img, k_prm, k_dp, k_par = jax.random.split(key, 4)

    raw_params = init_params(k_par, width=WIDTH, patch_size=PATCH, in_ch=C,
                             n_patches=N_PATCHES, layers=LAYERS, out_dim=OUT_DIM)
    params = prepare_params(raw_params, heads=HEADS)

    x = jax.random.normal(k_img, (B, C, RES, RES), jnp.float32)          # NCHW
    prompt_embeddings = 0.02 * jax.random.normal(
        k_prm, (NUM_PROMPTS, WIDTH), jnp.float32)
    deep_prompt_embeddings = 0.02 * jax.random.normal(
        k_dp, (LAYERS - 1, NUM_PROMPTS, WIDTH), jnp.float32)

    cls_feature, prompts_out = visual_encoder_forward(
        params, x, prompt_embeddings, deep_prompt_embeddings,
        heads=HEADS, num_prompts=NUM_PROMPTS, deep=True)

    jax.block_until_ready((cls_feature, prompts_out))
    assert cls_feature.shape == (B, OUT_DIM)
    assert prompts_out.shape == (B, NUM_PROMPTS, OUT_DIM)
    print("KERNEL_OK")
</pallas_src>

<mosaic_0001>
module attributes {stable_mosaic.version = 11 : i64} {
  func.func @kernel(%arg0: i32, %arg1: memref<256x192xf32, #tpu.memory_space<vmem>>, %arg2: memref<192x256xbf16, #tpu.memory_space<vmem>>, %arg3: memref<256x256xf32, #tpu.memory_space<vmem>>) attributes {dimension_semantics = [#tpu.dimension_semantics<parallel>], iteration_bounds = array<i64: 1>, scalar_prefetch = 0 : i64, scratch_operands = 0 : i64, tpu.core_type = #tpu.core_type<tc>, window_params = [{transform_indices = @transform_0, window_bounds = array<i64: 256, 192>}, {pipeline_mode = #tpu.pipeline_mode<synchronous>, transform_indices = @transform_1, window_bounds = array<i64: 192, 256>}, {transform_indices = @transform_2, window_bounds = array<i64: 256, 256>}]} {
    %c0 = arith.constant 0 : index
    %c0_0 = arith.constant 0 : index
    %0 = vector.load %arg1[%c0, %c0_0] : memref<256x192xf32, #tpu.memory_space<vmem>>, vector<256x192xf32>
    %1 = arith.truncf %0 : vector<256x192xf32> to vector<256x192xbf16>
    %c0_1 = arith.constant 0 : index
    %c0_2 = arith.constant 0 : index
    %2 = vector.load %arg2[%c0_1, %c0_2] : memref<192x256xbf16, #tpu.memory_space<vmem>>, vector<192x256xbf16>
    %cst = arith.constant dense<0.000000e+00> : vector<256x256xf32>
    %3 = tpu.matmul %1, %2, %cst {dimension_numbers = #tpu.dot_dimension_numbers<[1], [0], [0], [1], [0, 0, 1, 1], [], []>} : vector<256x192xbf16>, vector<192x256xbf16>, vector<256x256xf32> -> vector<256x256xf32>
    %c0_3 = arith.constant 0 : index
    %c0_4 = arith.constant 0 : index
    %4 = vector.load %arg3[%c0_3, %c0_4] : memref<256x256xf32, #tpu.memory_space<vmem>>, vector<256x256xf32>
    tpu.vector_store %arg3[%c0_3, %c0_4], %3 {strides = array<i32>} : memref<256x256xf32, #tpu.memory_space<vmem>>, vector<256x256xf32>,
    return
  }
  func.func @transform_0(%arg0: i32) -> (i32, i32) {
    %c0_i32 = arith.constant 0 : i32
    %c0_i32_0 = arith.constant 0 : i32
    return %arg0, %c0_i32 : i32, i32
  }
  func.func @transform_1(%arg0: i32) -> (i32, i32) {
    %c0_i32 = arith.constant 0 : i32
    %c0_i32_0 = arith.constant 0 : i32
    %c0_i32_1 = arith.constant 0 : i32
    return %c0_i32, %c0_i32_0 : i32, i32
  }
  func.func @transform_2(%arg0: i32) -> (i32, i32) {
    %c0_i32 = arith.constant 0 : i32
    %c0_i32_0 = arith.constant 0 : i32
    return %arg0, %c0_i32 : i32, i32
  }
}

</mosaic_0001>

<llo_original>
// kernel: tpu_custom_call.1
$region0: #{tpu_custom_call.1}
  #allocation0 [shape = 'u32[]', space=smem, size = 0x4, offset = 0x4, fixed_abs, tag = 'smem constant byte address 0x4 - core index']
  #allocation1 [shape = 'u32[144,128]{1,0:T(1,128)}', space=vmem, size = 0x12000, scoped, tag = 'internal scratch']
  %s0 = inlined_call_operand.vmem [shape: f32[256,192], index: 0, kind: input, shape index: {}]
  %s1 = inlined_call_operand.vmem [shape: bf16[192,256], index: 1, kind: input, shape index: {}]
  %s2 = inlined_call_operand.hbm [shape: f32[256,256], index: 2, kind: output, shape index: {}]
  %s3 = sld [smem:[#allocation0]]
  $region18: #{tpu_custom_call.1} parent=0
    _
  %s5 = ssub.s32 1, %s3
  %s6 = scalar_select 0, %s5, %s3
  $region1: #{tpu_custom_call.1} parent=0
    #allocation2 [shape = 'u8[262144]{0}', space=vmem, size = 0x40000, scoped, tag = 'output window, operand 0, single buffered']
    #allocation3 [shape = 's32[1]{0}', space=sflag, size = 0x4, scoped, tag = 'scoped memory for tpu_custom_call.1']
    %7 = vsyncpa [#allocation3], 0
    // Predicated region
    $region2: #{tpu_custom_call.1} parent=1 // pred_check
      _
    $region3: #{tpu_custom_call.1} parent=1 // pred_check_branch
      %9 = sbr.rel (0) target = $region5
    $region4: #{tpu_custom_call.1} parent=1 // pred_region
      _
    $region5: #{tpu_custom_call.1} parent=1 // pred_fallthru
      _
    // Predicated region
    $region6: #{tpu_custom_call.1} parent=1 // pred_check
      _
    $region7: #{tpu_custom_call.1} parent=1 // pred_check_branch
      %11 = sbr.rel (0) target = $region9
    $region8: #{tpu_custom_call.1} parent=1 // pred_region
      _
    $region9: #{tpu_custom_call.1} parent=1 // pred_fallthru
      _
    %v13 = vld [vmem:[%s0] sm:$0xff]
    %v14 = vld [vmem:[%s0 + $0x8] sm:$0xff]
    %v15 = vld [vmem:[%s0 + $0x10] sm:$0xff]
    %v16 = vld [vmem:[%s0 + $0x18] sm:$0xff]
    %v17 = vld [vmem:[%s0 + $0x20] sm:$0xff]
    %v18 = vld [vmem:[%s0 + $0x28] sm:$0xff]
    %v19 = vld [vmem:[%s0 + $0x30] sm:$0xff]
    %v20 = vld [vmem:[%s0 + $0x38] sm:$0xff]
    %v21 = vld [vmem:[%s0 + $0x40] sm:$0xff]
    %v22 = vld [vmem:[%s0 + $0x48] sm:$0xff]
    %v23 = vld [vmem:[%s0 + $0x50] sm:$0xff]
    %v24 = vld [vmem:[%s0 + $0x58] sm:$0xff]
    %v25 = vld [vmem:[%s0 + $0x60] sm:$0xff]
    %v26 = vld [vmem:[%s0 + $0x68] sm:$0xff]
    %v27 = vld [vmem:[%s0 + $0x70] sm:$0xff]
    %v28 = vld [vmem:[%s0 + $0x78] sm:$0xff]
    %v29 = vld [vmem:[%s0 + $0x80] sm:$0xff]
    %v30 = vld [vmem:[%s0 + $0x88] sm:$0xff]
    %v31 = vld [vmem:[%s0 + $0x90] sm:$0xff]
    %v32 = vld [vmem:[%s0 + $0x98] sm:$0xff]
    %v33 = vld [vmem:[%s0 + $0xa0] sm:$0xff]
    %v34 = vld [vmem:[%s0 + $0xa8] sm:$0xff]
    %v35 = vld [vmem:[%s0 + $0xb0] sm:$0xff]
    %v36 = vld [vmem:[%s0 + $0xb8] sm:$0xff]
    %v37 = vld [vmem:[%s0 + $0xc0] sm:$0xff]
    %v38 = vld [vmem:[%s0 + $0xc8] sm:$0xff]
    %v39 = vld [vmem:[%s0 + $0xd0] sm:$0xff]
    %v40 = vld [vmem:[%s0 + $0xd8] sm:$0xff]
    %v41 = vld [vmem:[%s0 + $0xe0] sm:$0xff]
    %v42 = vld [vmem:[%s0 + $0xe8] sm:$0xff]
    %v43 = vld [vmem:[%s0 + $0xf0] sm:$0xff]
    %v44 = vld [vmem:[%s0 + $0xf8] sm:$0xff]
    %v45 = vld [vmem:[%s0 + $0x100] sm:$0xff]
    %v46 = vld [vmem:[%s0 + $0x108] sm:$0xff]
    %v47 = vld [vmem:[%s0 + $0x110] sm:$0xff]
    %v48 = vld [vmem:[%s0 + $0x118] sm:$0xff]
    %v49 = vld [vmem:[%s0 + $0x120] sm:$0xff]
    %v50 = vld [vmem:[%s0 + $0x128] sm:$0xff]
    %v51 = vld [vmem:[%s0 + $0x130] sm:$0xff]
    %v52 = vld [vmem:[%s0 + $0x138] sm:$0xff]
    %v53 = vld [vmem:[%s0 + $0x140] sm:$0xff]
    %v54 = vld [vmem:[%s0 + $0x148] sm:$0xff]
    %v55 = vld [vmem:[%s0 + $0x150] sm:$0xff]
    %v56 = vld [vmem:[%s0 + $0x158] sm:$0xff]
    %v57 = vld [vmem:[%s0 + $0x160] sm:$0xff]
    %v58 = vld [vmem:[%s0 + $0x168] sm:$0xff]
    %v59 = vld [vmem:[%s0 + $0x170] sm:$0xff]
    %v60 = vld [vmem:[%s0 + $0x178] sm:$0xff]
    %v61 = vld [vmem:[%s0 + $0x180] sm:$0xff]
    %v62 = vld [vmem:[%s0 + $0x188] sm:$0xff]
    %v63 = vld [vmem:[%s0 + $0x190] sm:$0xff]
    %v64 = vld [vmem:[%s0 + $0x198] sm:$0xff]
    %v65 = vld [vmem:[%s0 + $0x1a0] sm:$0xff]
    %v66 = vld [vmem:[%s0 + $0x1a8] sm:$0xff]
    %v67 = vld [vmem:[%s0 + $0x1b0] sm:$0xff]
    %v68 = vld [vmem:[%s0 + $0x1b8] sm:$0xff]
    %v69 = vld [vmem:[%s0 + $0x1c0] sm:$0xff]
    %v70 = vld [vmem:[%s0 + $0x1c8] sm:$0xff]
    %v71 = vld [vmem:[%s0 + $0x1d0] sm:$0xff]
    %v72 = vld [vmem:[%s0 + $0x1d8] sm:$0xff]
    %v73 = vld [vmem:[%s0 + $0x1e0] sm:$0xff]
    %v74 = vld [vmem:[%s0 + $0x1e8] sm:$0xff]
    %v75 = vld [vmem:[%s0 + $0x1f0] sm:$0xff]
    %v76 = vld [vmem:[%s0 + $0x1f8] sm:$0xff]
    %v77 = vpack.c.bf16 %v15, %v13
    %v78 = vpack.c.bf16 %v16, %v14
    %v79 = vpack.c.bf16 %v19, %v17
    %v80 = vpack.c.bf16 %v20, %v18
    %v81 = vpack.c.bf16 %v23, %v21
    %v82 = vpack.c.bf16 %v24, %v22
    %v83 = vpack.c.bf16 %v27, %v25
    %v84 = vpack.c.bf16 %v28, %v26
    %v85 = vpack.c.bf16 %v31, %v29
    %v86 = vpack.c.bf16 %v32, %v30
    %v87 = vpack.c.bf16 %v35, %v33
    %v88 = vpack.c.bf16 %v36, %v34
    %v89 = vpack.c.bf16 %v39, %v37
    %v90 = vpack.c.bf16 %v40, %v38
    %v91 = vpack.c.bf16 %v43, %v41
    %v92 = vpack.c.bf16 %v44, %v42
    %v93 = vpack.c.bf16 %v47, %v45
    %v94 = vpack.c.bf16 %v48, %v46
    %v95 = vpack.c.bf16 %v51, %v49
    %v96 = vpack.c.bf16 %v52, %v50
    %v97 = vpack.c.bf16 %v55, %v53
    %v98 = vpack.c.bf16 %v56, %v54
    %v99 = vpack.c.bf16 %v59, %v57
    %v100 = vpack.c.bf16 %v60, %v58
    %v101 = vpack.c.bf16 %v63, %v61
    %v102 = vpack.c.bf16 %v64, %v62
    %v103 = vpack.c.bf16 %v67, %v65
    %v104 = vpack.c.bf16 %v68, %v66
    %v105 = vpack.c.bf16 %v71, %v69
    %v106 = vpack.c.bf16 %v72, %v70
    %v107 = vpack.c.bf16 %v75, %v73
    %v108 = vpack.c.bf16 %v76, %v74
    %v109 = vld [vmem:[%s1] sm:$0xff]
    %v110 = vld [vmem:[%s1 + $0x8] sm:$0xff]
    %v111 = vld [vmem:[%s1 + $0x10] sm:$0xff]
    %v112 = vld [vmem:[%s1 + $0x18] sm:$0xff]
    %v113 = vld [vmem:[%s1 + $0x20] sm:$0xff]
    %v114 = vld [vmem:[%s1 + $0x28] sm:$0xff]
    %v115 = vld [vmem:[%s1 + $0x30] sm:$0xff]
    %v116 = vld [vmem:[%s1 + $0x38] sm:$0xff]
    %v117 = vld [vmem:[%s1 + $0x40] sm:$0xff]
    %v118 = vld [vmem:[%s1 + $0x48] sm:$0xff]
    %v119 = vld [vmem:[%s1 + $0x50] sm:$0xff]
    %v120 = vld [vmem:[%s1 + $0x58] sm:$0xff]
    %v121 = vld [vmem:[%s1 + $0x60] sm:$0xff]
    %v122 = vld [vmem:[%s1 + $0x68] sm:$0xff]
    %v123 = vld [vmem:[%s1 + $0x70] sm:$0xff]
    %v124 = vld [vmem:[%s1 + $0x78] sm:$0xff]
    %v125 = vld [vmem:[%s1 + $0x80] sm:$0xff]
    %v126 = vld [vmem:[%s1 + $0x88] sm:$0xff]
    %v127 = vld [vmem:[%s1 + $0x90] sm:$0xff]
    %v128 = vld [vmem:[%s1 + $0x98] sm:$0xff]
    %v129 = vld [vmem:[%s1 + $0xa0] sm:$0xff]
    %v130 = vld [vmem:[%s1 + $0xa8] sm:$0xff]
    %v131 = vld [vmem:[%s1 + $0xb0] sm:$0xff]
    %v132 = vld [vmem:[%s1 + $0xb8] sm:$0xff]
    %v157 = vunpack.c.l.b16 %v109
    %v158 = vunpack.c.h.b16 %v109
    %v159 = vunpack.c.l.b16 %v110
    %v160 = vunpack.c.h.b16 %v110
    %v161 = vunpack.c.l.b16 %v111
    %v162 = vunpack.c.h.b16 %v111
    %v163 = vunpack.c.l.b16 %v112
    %v164 = vunpack.c.h.b16 %v112
    %v165 = vunpack.c.l.b16 %v113
    %v166 = vunpack.c.h.b16 %v113
    %v167 = vunpack.c.l.b16 %v114
    %v168 = vunpack.c.h.b16 %v114
    %v169 = vunpack.c.l.b16 %v115
    %v170 = vunpack.c.h.b16 %v115
    %v171 = vunpack.c.l.b16 %v116
    %v172 = vunpack.c.h.b16 %v116
    %v173 = vunpack.c.l.b16 %v117
    %v174 = vunpack.c.h.b16 %v117
    %v175 = vunpack.c.l.b16 %v118
    %v176 = vunpack.c.h.b16 %v118
    %v177 = vunpack.c.l.b16 %v119
    %v178 = vunpack.c.h.b16 %v119
    %v179 = vunpack.c.l.b16 %v120
    %v180 = vunpack.c.h.b16 %v120
    %v181 = vunpack.c.l.b16 %v121
    %v182 = vunpack.c.h.b16 %v121
    %v183 = vunpack.c.l.b16 %v122
    %v184 = vunpack.c.h.b16 %v122
    %v185 = vunpack.c.l.b16 %v123
    %v186 = vunpack.c.h.b16 %v123
    %v187 = vunpack.c.l.b16 %v124
    %v188 = vunpack.c.h.b16 %v124
    %v189 = vunpack.c.l.b16 %v125
    %v190 = vunpack.c.h.b16 %v125
    %v191 = vunpack.c.l.b16 %v126
    %v192 = vunpack.c.h.b16 %v126
    %v193 = vunpack.c.l.b16 %v127
    %v194 = vunpack.c.h.b16 %v127
    %v195 = vunpack.c.l.b16 %v128
    %v196 = vunpack.c.h.b16 %v128
    %v197 = vunpack.c.l.b16 %v129
    %v198 = vunpack.c.h.b16 %v129
    %v199 = vunpack.c.l.b16 %v130
    %v200 = vunpack.c.h.b16 %v130
    %v201 = vunpack.c.l.b16 %v131
    %v202 = vunpack.c.h.b16 %v131
    %v203 = vunpack.c.l.b16 %v132
    %v204 = vunpack.c.h.b16 %v132
    %v205 = vpack.c.b16 %v159, %v157
    %v206 = vpack.c.b16 %v160, %v158
    %v207 = vpack.c.b16 %v163, %v161
    %v208 = vpack.c.b16 %v164, %v162
    %v209 = vpack.c.b16 %v167, %v165
    %v210 = vpack.c.b16 %v168, %v166
    %v211 = vpack.c.b16 %v171, %v169
    %v212 = vpack.c.b16 %v172, %v170
    %v213 = vpack.c.b16 %v175, %v173
    %v214 = vpack.c.b16 %v176, %v174
    %v215 = vpack.c.b16 %v179, %v177
    %v216 = vpack.c.b16 %v180, %v178
    %v217 = vpack.c.b16 %v183, %v181
    %v218 = vpack.c.b16 %v184, %v182
    %v219 = vpack.c.b16 %v187, %v185
    %v220 = vpack.c.b16 %v188, %v186
    %v221 = vpack.c.b16 %v191, %v189
    %v222 = vpack.c.b16 %v192, %v190
    %v223 = vpack.c.b16 %v195, %v193
    %v224 = vpack.c.b16 %v196, %v194
    %v225 = vpack.c.b16 %v199, %v197
    %v226 = vpack.c.b16 %v200, %v198
    %v227 = vpack.c.b16 %v203, %v201
    %v228 = vpack.c.b16 %v204, %v202
    %vm253 = vcmask 523264
    %v255 = vsel %vm253, %v78, 0
    %v258 = vsel %vm253, %v80, 0
    %v261 = vsel %vm253, %v82, 0
    %v264 = vsel %vm253, %v84, 0
    %v267 = vsel %vm253, %v86, 0
    %v270 = vsel %vm253, %v88, 0
    %v273 = vsel %vm253, %v90, 0
    %v276 = vsel %vm253, %v92, 0
    %v279 = vsel %vm253, %v94, 0
    %v282 = vsel %vm253, %v96, 0
    %v285 = vsel %vm253, %v98, 0
    %v288 = vsel %vm253, %v100, 0
    %v291 = vsel %vm253, %v102, 0
    %v294 = vsel %vm253, %v104, 0
    %v297 = vsel %vm253, %v106, 0
    %v300 = vsel %vm253, %v108, 0
    %302 = vmatprep.subr.bf16.mxu0 %v206
    %303 = vmatpush1.bf16.msra.mxu0 %v205
    %304 = vmatprep.subr.bf16.mxu0 %v208
    %305 = vmatpush1.bf16.msra.mxu0 %v207
    %306 = vmatprep.subr.bf16.mxu0 %v210
    %307 = vmatpush1.bf16.msra.mxu0 %v209
    %308 = vmatprep.subr.bf16.mxu0 %v212
    %309 = vmatpush1.bf16.msra.mxu0 %v211
    %310 = vmatprep.subr.bf16.mxu0 %v214
    %311 = vmatpush1.bf16.msra.mxu0 %v213
    %312 = vmatprep.subr.bf16.mxu0 %v216
    %313 = vmatpush1.bf16.msra.mxu0 %v215
    %314 = vmatprep.subr.bf16.mxu0 %v218
    %315 = vmatpush1.bf16.msra.mxu0 %v217
    %316 = vmatprep.subr.bf16.mxu0 %v220
    %317 = vmatpush1.bf16.msra.mxu0 %v219
    %318 = vmatprep.subr.bf16.mxu0 %v222
    %319 = vmatpush1.bf16.msra.mxu0 %v221
    %320 = vmatprep.subr.bf16.mxu0 %v224
    %321 = vmatpush1.bf16.msra.mxu0 %v223
    %322 = vmatprep.subr.bf16.mxu0 %v226
    %323 = vmatpush1.bf16.msra.mxu0 %v225
    %324 = vmatprep.subr.bf16.mxu0 %v228
    %325 = vmatpush1.bf16.msra.mxu0 %v227
    %326 = vmatprep.subr.bf16.mxu0 0
    %327 = vmatpush1.bf16.msra.mxu0 0
    %328 = vmatprep.subr.bf16.mxu0 0
    %329 = vmatpush1.bf16.msra.mxu0 0
    %330 = vmatprep.subr.bf16.mxu0 0
    %331 = vmatpush1.bf16.msra.mxu0 0
    %332 = vmatprep.subr.bf16.mxu0 0
    %333 = vmatpush1.bf16.msra.mxu0 0
    %334 = vmatprep.mubr.bf16.mxu0 %v255
    %335 = vmatmul.mubr.bf16.gmra.mrb[0].mxu0 %v77
    %v336 = vpop.f32.mrb[0].mxu0
    %v337 = vadd.f32 0.0, %v336
    %v338 = vpop.f32.mrb[0].mxu0
    %v339 = vadd.f32 0.0, %v338
    %v340 = vpop.f32.mrb[0].mxu0
    %v341 = vadd.f32 0.0, %v340
    %v342 = vpop.f32.mrb[0].mxu0
    %v343 = vadd.f32 0.0, %v342
    %344 = vmatprep.mubr.bf16.mxu0 %v258
    %345 = vmatmul.mubr.bf16.gmra.mrb[0].mxu0 %v79
    %v346 = vpop.f32.mrb[0].mxu0
    %v347 = vadd.f32 0.0, %v346
    %v348 = vpop.f32.mrb[0].mxu0
    %v349 = vadd.f32 0.0, %v348
    %v350 = vpop.f32.mrb[0].mxu0
    %v351 = vadd.f32 0.0, %v350
    %v352 = vpop.f32.mrb[0].mxu0
    %v353 = vadd.f32 0.0, %v352
    %354 = vmatprep.mubr.bf16.mxu0 %v261
    %355 = vmatmul.mubr.bf16.gmra.mrb[0].mxu0 %v81
    %v356 = vpop.f32.mrb[0].mxu0
    %v357 = vadd.f32 0.0, %v356
    %v358 = vpop.f32.mrb[0].mxu0
    %v359 = vadd.f32 0.0, %v358
    %v360 = vpop.f32.mrb[0].mxu0
    %v361 = vadd.f32 0.0, %v360
    %v362 = vpop.f32.mrb[0].mxu0
    %v363 = vadd.f32 0.0, %v362
    %364 = vmatprep.mubr.bf16.mxu0 %v264
    %365 = vmatmul.mubr.bf16.gmra.mrb[0].mxu0 %v83
    %v366 = vpop.f32.mrb[0].mxu0
    %v367 = vadd.f32 0.0, %v366
    %v368 = vpop.f32.mrb[0].mxu0
    %v369 = vadd.f32 0.0, %v368
    %v370 = vpop.f32.mrb[0].mxu0
    %v371 = vadd.f32 0.0, %v370
    %v372 = vpop.f32.mrb[0].mxu0
    %v373 = vadd.f32 0.0, %v372
    %374 = vmatprep.mubr.bf16.mxu0 %v267
    %375 = vmatmul.mubr.bf16.gmra.mrb[0].mxu0 %v85
    %v376 = vpop.f32.mrb[0].mxu0
    %v377 = vadd.f32 0.0, %v376
    %v378 = vpop.f32.mrb[0].mxu0
    %v379 = vadd.f32 0.0, %v378
    %v380 = vpop.f32.mrb[0].mxu0
    %v381 = vadd.f32 0.0, %v380
    %v382 = vpop.f32.mrb[0].mxu0
    %v383 = vadd.f32 0.0, %v382
    %384 = vmatprep.mubr.bf16.mxu0 %v270
    %385 = vmatmul.mubr.bf16.gmra.mrb[0].mxu0 %v87
    %v386 = vpop.f32.mrb[0].mxu0
    %v387 = vadd.f32 0.0, %v386
    %v388 = vpop.f32.mrb[0].mxu0
    %v389 = vadd.f32 0.0, %v388
    %v390 = vpop.f32.mrb[0].mxu0
    %v391 = vadd.f32 0.0, %v390
    %v392 = vpop.f32.mrb[0].mxu0
    %v393 = vadd.f32 0.0, %v392
    %394 = vmatprep.mubr.bf16.mxu0 %v273
    %395 = vmatmul.mubr.bf16.gmra.mrb[0].mxu0 %v89
    %v396 = vpop.f32.mrb[0].mxu0
    %v397 = vadd.f32 0.0, %v396
    %v398 = vpop.f32.mrb[0].mxu0
    %v399 = vadd.f32 0.0, %v398
    %v400 = vpop.f32.mrb[0].mxu0
    %v401 = vadd.f32 0.0, %v400
    %v402 = vpop.f32.mrb[0].mxu0
    %v403 = vadd.f32 0.0, %v402
    %404 = vmatprep.mubr.bf16.mxu0 %v276
    %405 = vmatmul.mubr.bf16.gmra.mrb[0].mxu0 %v91
    %v406 = vpop.f32.mrb[0].mxu0
    %v407 = vadd.f32 0.0, %v406
    %v408 = vpop.f32.mrb[0].mxu0
    %v409 = vadd.f32 0.0, %v408
    %v410 = vpop.f32.mrb[0].mxu0
    %v411 = vadd.f32 0.0, %v410
    %v412 = vpop.f32.mrb[0].mxu0
    %v413 = vadd.f32 0.0, %v412
    %414 = vmatprep.mubr.bf16.mxu0 %v279
    %415 = vmatmul.mubr.bf16.gmra.mrb[0].mxu0 %v93
    %v416 = vpop.f32.mrb[0].mxu0
    %v417 = vadd.f32 0.0, %v416
    %v418 = vpop.f32.mrb[0].mxu0
    %v419 = vadd.f32 0.0, %v418
    %v420 = vpop.f32.mrb[0].mxu0
    %v421 = vadd.f32 0.0, %v420
    %v422 = vpop.f32.mrb[0].mxu0
    %v423 = vadd.f32 0.0, %v422
    %424 = vmatprep.mubr.bf16.mxu0 %v282
    %425 = vmatmul.mubr.bf16.gmra.mrb[0].mxu0 %v95
    %v426 = vpop.f32.mrb[0].mxu0
    %v427 = vadd.f32 0.0, %v426
    %v428 = vpop.f32.mrb[0].mxu0
    %v429 = vadd.f32 0.0, %v428
    %v430 = vpop.f32.mrb[0].mxu0
    %v431 = vadd.f32 0.0, %v430
    %v432 = vpop.f32.mrb[0].mxu0
    %v433 = vadd.f32 0.0, %v432
    %434 = vmatprep.mubr.bf16.mxu0 %v285
    %435 = vmatmul.mubr.bf16.gmra.mrb[0].mxu0 %v97
    %v436 = vpop.f32.mrb[0].mxu0
    %v437 = vadd.f32 0.0, %v436
    %v438 = vpop.f32.mrb[0].mxu0
    %v439 = vadd.f32 0.0, %v438
    %v440 = vpop.f32.mrb[0].mxu0
    %v441 = vadd.f32 0.0, %v440
    %v442 = vpop.f32.mrb[0].mxu0
    %v443 = vadd.f32 0.0, %v442
    %444 = vmatprep.mubr.bf16.mxu0 %v288
    %445 = vmatmul.mubr.bf16.gmra.mrb[0].mxu0 %v99
    %v446 = vpop.f32.mrb[0].mxu0
    %v447 = vadd.f32 0.0, %v446
    %v448 = vpop.f32.mrb[0].mxu0
    %v449 = vadd.f32 0.0, %v448
    %v450 = vpop.f32.mrb[0].mxu0
    %v451 = vadd.f32 0.0, %v450
    %v452 = vpop.f32.mrb[0].mxu0
    %v453 = vadd.f32 0.0, %v452
    %454 = vmatprep.mubr.bf16.mxu0 %v291
    %455 = vmatmul.mubr.bf16.gmra.mrb[0].mxu0 %v101
    %v456 = vpop.f32.mrb[0].mxu0
    %v457 = vadd.f32 0.0, %v456
    %v458 = vpop.f32.mrb[0].mxu0
    %v459 = vadd.f32 0.0, %v458
    %v460 = vpop.f32.mrb[0].mxu0
    %v461 = vadd.f32 0.0, %v460
    %v462 = vpop.f32.mrb[0].mxu0
    %v463 = vadd.f32 0.0, %v462
    %464 = vmatprep.mubr.bf16.mxu0 %v294
    %465 = vmatmul.mubr.bf16.gmra.mrb[0].mxu0 %v103
    %v466 = vpop.f32.mrb[0].mxu0
    %v467 = vadd.f32 0.0, %v466
    %v468 = vpop.f32.mrb[0].mxu0
    %v469 = vadd.f32 0.0, %v468
    %v470 = vpop.f32.mrb[0].mxu0
    %v471 = vadd.f32 0.0, %v470
    %v472 = vpop.f32.mrb[0].mxu0
    %v473 = vadd.f32 0.0, %v472
    %474 = vmatprep.mubr.bf16.mxu0 %v297
    %475 = vmatmul.mubr.bf16.gmra.mrb[0].mxu0 %v105
    %v476 = vpop.f32.mrb[0].mxu0
    %v477 = vadd.f32 0.0, %v476
    %v478 = vpop.f32.mrb[0].mxu0
    %v479 = vadd.f32 0.0, %v478
    %v480 = vpop.f32.mrb[0].mxu0
    %v481 = vadd.f32 0.0, %v480
    %v482 = vpop.f32.mrb[0].mxu0
    %v483 = vadd.f32 0.0, %v482
    %484 = vmatprep.mubr.bf16.mxu0 %v300
    %485 = vmatmul.mubr.bf16.gmra.mrb[0].mxu0 %v107
    %v486 = vpop.f32.mrb[0].mxu0
    %v487 = vadd.f32 0.0, %v486
    %v488 = vpop.f32.mrb[0].mxu0
    %v489 = vadd.f32 0.0, %v488
    %v490 = vpop.f32.mrb[0].mxu0
    %v491 = vadd.f32 0.0, %v490
    %v492 = vpop.f32.mrb[0].mxu0
    %v493 = vadd.f32 0.0, %v492
    %494 = vdwg.mxu0
    %495 = vst [vmem:[#allocation2] sm:$0xff] %v337
    %496 = vst [vmem:[#allocation2 + $0x8] sm:$0xff] %v339
    %497 = vst [vmem:[#allocation2 + $0x10] sm:$0xff] %v341
    %498 = vst [vmem:[#allocation2 + $0x18] sm:$0xff] %v343
    %499 = vst [vmem:[#allocation2 + $0x20] sm:$0xff] %v347
    %500 = vst [vmem:[#allocation2 + $0x28] sm:$0xff] %v349
    %501 = vst [vmem:[#allocation2 + $0x30] sm:$0xff] %v351
    %502 = vst [vmem:[#allocation2 + $0x38] sm:$0xff] %v353
    %503 = vst [vmem:[#allocation2 + $0x40] sm:$0xff] %v357
    %504 = vst [vmem:[#allocation2 + $0x48] sm:$0xff] %v359
    %505 = vst [vmem:[#allocation2 + $0x50] sm:$0xff] %v361
    %506 = vst [vmem:[#allocation2 + $0x58] sm:$0xff] %v363
    %507 = vst [vmem:[#allocation2 + $0x60] sm:$0xff] %v367
    %508 = vst [vmem:[#allocation2 + $0x68] sm:$0xff] %v369
    %509 = vst [vmem:[#allocation2 + $0x70] sm:$0xff] %v371
    %510 = vst [vmem:[#allocation2 + $0x78] sm:$0xff] %v373
    %511 = vst [vmem:[#allocation2 + $0x80] sm:$0xff] %v377
    %512 = vst [vmem:[#allocation2 + $0x88] sm:$0xff] %v379
    %513 = vst [vmem:[#allocation2 + $0x90] sm:$0xff] %v381
    %514 = vst [vmem:[#allocation2 + $0x98] sm:$0xff] %v383
    %515 = vst [vmem:[#allocation2 + $0xa0] sm:$0xff] %v387
    %516 = vst [vmem:[#allocation2 + $0xa8] sm:$0xff] %v389
    %517 = vst [vmem:[#allocation2 + $0xb0] sm:$0xff] %v391
    %518 = vst [vmem:[#allocation2 + $0xb8] sm:$0xff] %v393
    %519 = vst [vmem:[#allocation2 + $0xc0] sm:$0xff] %v397
    %520 = vst [vmem:[#allocation2 + $0xc8] sm:$0xff] %v399
    %521 = vst [vmem:[#allocation2 + $0xd0] sm:$0xff] %v401
    %522 = vst [vmem:[#allocation2 + $0xd8] sm:$0xff] %v403
    %523 = vst [vmem:[#allocation2 + $0xe0] sm:$0xff] %v407
    %524 = vst [vmem:[#allocation2 + $0xe8] sm:$0xff] %v409
    %525 = vst [vmem:[#allocation2 + $0xf0] sm:$0xff] %v411
    %526 = vst [vmem:[#allocation2 + $0xf8] sm:$0xff] %v413
    %527 = vst [vmem:[#allocation2 + $0x100] sm:$0xff] %v417
    %528 = vst [vmem:[#allocation2 + $0x108] sm:$0xff] %v419
    %529 = vst [vmem:[#allocation2 + $0x110] sm:$0xff] %v421
    %530 = vst [vmem:[#allocation2 + $0x118] sm:$0xff] %v423
    %531 = vst [vmem:[#allocation2 + $0x120] sm:$0xff] %v427
    %532 = vst [vmem:[#allocation2 + $0x128] sm:$0xff] %v429
    %533 = vst [vmem:[#allocation2 + $0x130] sm:$0xff] %v431
    %534 = vst [vmem:[#allocation2 + $0x138] sm:$0xff] %v433
    %535 = vst [vmem:[#allocation2 + $0x140] sm:$0xff] %v437
    %536 = vst [vmem:[#allocation2 + $0x148] sm:$0xff] %v439
    %537 = vst [vmem:[#allocation2 + $0x150] sm:$0xff] %v441
    %538 = vst [vmem:[#allocation2 + $0x158] sm:$0xff] %v443
    %539 = vst [vmem:[#allocation2 + $0x160] sm:$0xff] %v447
    %540 = vst [vmem:[#allocation2 + $0x168] sm:$0xff] %v449
    %541 = vst [vmem:[#allocation2 + $0x170] sm:$0xff] %v451
    %542 = vst [vmem:[#allocation2 + $0x178] sm:$0xff] %v453
    %543 = vst [vmem:[#allocation2 + $0x180] sm:$0xff] %v457
    %544 = vst [vmem:[#allocation2 + $0x188] sm:$0xff] %v459
    %545 = vst [vmem:[#allocation2 + $0x190] sm:$0xff] %v461
    %546 = vst [vmem:[#allocation2 + $0x198] sm:$0xff] %v463
    %547 = vst [vmem:[#allocation2 + $0x1a0] sm:$0xff] %v467
    %548 = vst [vmem:[#allocation2 + $0x1a8] sm:$0xff] %v469
    %549 = vst [vmem:[#allocation2 + $0x1b0] sm:$0xff] %v471
    %550 = vst [vmem:[#allocation2 + $0x1b8] sm:$0xff] %v473
    %551 = vst [vmem:[#allocation2 + $0x1c0] sm:$0xff] %v477
    %552 = vst [vmem:[#allocation2 + $0x1c8] sm:$0xff] %v479
    %553 = vst [vmem:[#allocation2 + $0x1d0] sm:$0xff] %v481
    %554 = vst [vmem:[#allocation2 + $0x1d8] sm:$0xff] %v483
    %555 = vst [vmem:[#allocation2 + $0x1e0] sm:$0xff] %v487
    %556 = vst [vmem:[#allocation2 + $0x1e8] sm:$0xff] %v489
    %557 = vst [vmem:[#allocation2 + $0x1f0] sm:$0xff] %v491
    %558 = vst [vmem:[#allocation2 + $0x1f8] sm:$0xff] %v493
    // Predicated region
    $region10: #{tpu_custom_call.1} parent=1 // pred_check
      _
    $region11: #{tpu_custom_call.1} parent=1 // pred_check_branch
      %560 = sbr.rel (0) target = $region13
    $region12: #{tpu_custom_call.1} parent=1 // pred_region
      %s562 = ssub.s32 8192, 8192
      %563 = vsyncadd [#allocation3], %s562
      %s564 = sshll.u32 [#allocation2], 4
      %s565 = int_to_ptr.vmem [resolvable:$true] %s564
      %570 = dma.vmem_to_hbm [thread:$0]  %s565, 8192, %s2, [#allocation3], 256, 256, 16
    $region13: #{tpu_custom_call.1} parent=1 // pred_fallthru
      _
    // Predicated region
    $region14: #{tpu_custom_call.1} parent=1 // pred_check
      _
    $region15: #{tpu_custom_call.1} parent=1 // pred_check_branch
      %572 = sbr.rel (0) target = $region17
    $region16: #{tpu_custom_call.1} parent=1 // pred_region
      %573 = dma.done [#allocation3], 8192
    $region17: #{tpu_custom_call.1} parent=1 // pred_fallthru
      _
    %574 = vsyncpa [#allocation3], 1

</llo_original>
